<compile_context>
chip_gen: v5e
topology: v5e:2x2
jax: 0.10.0
libtpu: 0.0.40
codegen_flags: <defaults>
</compile_context>

<pallas_src>
import functools

import numpy as np
import jax
import jax.numpy as jnp
from jax.experimental import pallas as pl
from jax.experimental.pallas import tpu as pltpu


def _axis_weight_np(out_size: int, in_size: int) -> np.ndarray:
    """Row-stochastic (out_size, in_size) matrix reproducing PyTorch
    F.interpolate(mode='bilinear', align_corners=False) along one axis."""
    scale = in_size / out_size
    src = (np.arange(out_size, dtype=np.float64) + 0.5) * scale - 0.5
    src = np.clip(src, 0.0, float(in_size - 1))
    lo = np.floor(src).astype(np.int64)
    hi = np.minimum(lo + 1, in_size - 1)
    frac = src - lo
    w = np.zeros((out_size, in_size), dtype=np.float64)
    rows = np.arange(out_size)
    np.add.at(w, (rows, lo), 1.0 - frac)
    np.add.at(w, (rows, hi), frac)
    return w


@functools.lru_cache(maxsize=None)
def _fused_weight(h_in: int, w_in: int, h_out: int, w_out: int) -> np.ndarray:
    """Host-cached fused weight W[h*W_in+w, o*W_out+p] = Wh[o,h]*Ww[p,w],
    i.e. kron(Wh.T, Ww.T). Returned as bfloat16 when the cast is lossless
    (halves weight DMA), otherwise float32."""
    wh = _axis_weight_np(h_out, h_in)          # (H_out, H_in)
    ww = _axis_weight_np(w_out, w_in)          # (W_out, W_in)
    w = np.kron(wh.T, ww.T).astype(np.float32)  # (H_in*W_in, H_out*W_out)
    w_bf16 = w.astype(jnp.bfloat16)
    if np.array_equal(np.asarray(w_bf16, dtype=np.float32), w):
        return w_bf16
    return w


def _interp_kernel(x_ref, w_ref, o_ref):
    # x_ref: (block_m, H_in*W_in) f32      block of flattened images
    # w_ref: (H_in*W_in, l_block) bf16/f32 fused bilinear weight block
    # o_ref: (block_m, l_block)   f32
    w = w_ref[...].astype(jnp.float32)  # lossless up-cast (VPU), no-op if f32
    o_ref[...] = jnp.dot(
        x_ref[...], w, preferred_element_type=jnp.float32
    ).astype(o_ref.dtype)


def _round_up(a: int, b: int) -> int:
    return ((a + b - 1) // b) * b


@functools.partial(jax.jit, static_argnames=("size",))
def interpolate_bilinear(x: jnp.ndarray, *, size) -> jnp.ndarray:
    """x: (N, C, H, W) -> (N, C, size[0], size[1]), matching
    torch.nn.functional.interpolate(x, size=size, mode='bilinear')."""
    n, c, h_in, w_in = x.shape
    h_out, w_out = size
    m = n * c
    k = h_in * w_in          # contraction dim (256 here)
    l = h_out * w_out        # lane-dense output dim (1024 here)

    # Host-built constant weight (no per-call einsum ops in the XLA graph).
    w_comb = _fused_weight(h_in, w_in, h_out, w_out)   # (k, l), bf16 or f32
    w_itemsize = np.dtype(w_comb.dtype).itemsize

    # Image-axis blocking: as large as reasonable (fewer ~0.35us grid steps),
    # sublane (8) aligned.
    m_pad8 = _round_up(m, 8)
    block_m = min(m_pad8, 1024)
    m_pad = _round_up(m, block_m)
    grid_m = m_pad // block_m

    x2d = x.reshape(m, k).astype(jnp.float32)
    if m_pad != m:
        x2d = jnp.pad(x2d, ((0, m_pad - m), (0, 0)))

    # If the image axis gives only one grid step, split the output columns in
    # two lane-dense halves so v7x can shard across both TensorCores.
    split_l = (grid_m == 1) and (l % 256 == 0) and (l >= 256)
    if split_l:
        l_block = l // 2
        grid = (grid_m, 2)
        dims = ("parallel", "parallel")
        in_specs = [
            pl.BlockSpec((block_m, k), lambda i, j: (i, 0)),
            pl.BlockSpec((k, l_block), lambda i, j: (0, j)),
        ]
        out_spec = pl.BlockSpec((block_m, l_block), lambda i, j: (i, j))
    else:
        l_block = l
        grid = (grid_m,)
        dims = ("parallel",)
        in_specs = [
            pl.BlockSpec((block_m, k), lambda i: (i, 0)),
            pl.BlockSpec((k, l_block), lambda i: (0, 0)),  # resident weight
        ]
        out_spec = pl.BlockSpec((block_m, l_block), lambda i: (i, 0))

    # VMEM budget: double-buffered x/out blocks + (conservatively) double-
    # buffered weight, with headroom; capped safely below physical VMEM
    # (v7x only has 64 MiB physical).
    block_bytes = 2 * 4 * block_m * (k + l_block) + 2 * w_itemsize * k * l_block
    try:
        phys_vmem = int(pltpu.get_tpu_info().vmem_capacity_bytes)
    except Exception:
        phys_vmem = 64 << 20
    vmem_cap = min((phys_vmem * 3) // 4, 96 << 20)
    vmem_limit = int(min(max(2 * block_bytes, 32 << 20), vmem_cap))

    out2d = pl.pallas_call(
        _interp_kernel,
        out_shape=jax.ShapeDtypeStruct((m_pad, l), jnp.float32),
        grid=grid,
        in_specs=in_specs,
        out_specs=out_spec,
        compiler_params=pltpu.CompilerParams(
            dimension_semantics=dims,
            vmem_limit_bytes=vmem_limit,
        ),
    )(x2d, w_comb)

    out2d = out2d[:m].astype(x.dtype)
    return out2d.reshape(n, c, h_out, w_out)


if __name__ == "__main__":
    # Module instantiation equivalent: Interpolate(size=(32, 32), mode="bilinear")
    size = (32, 32)

    key = jax.random.PRNGKey(0)
    x = jax.random.normal(key, (2, 4, 16, 16), dtype=jnp.float32)  # NCHW

    y = interpolate_bilinear(x, size=size)
    jax.block_until_ready(y)

    assert y.shape == (2, 4, 32, 32), y.shape

    # Cross-check against a pure-JAX separable bilinear reference.
    wh = jnp.asarray(_axis_weight_np(size[0], x.shape[2]), dtype=jnp.float32)
    ww = jnp.asarray(_axis_weight_np(size[1], x.shape[3]), dtype=jnp.float32)
    y_ref = jnp.einsum("oh,nchw,pw->ncop", wh, x, ww)
    assert jnp.allclose(y, y_ref, atol=1e-5, rtol=1e-5), float(
        jnp.max(jnp.abs(y - y_ref))
    )

    print("KERNEL_OK")
</pallas_src>

<mosaic_0001>
module attributes {stable_mosaic.version = 11 : i64} {
  func.func @_interp_kernel(%arg0: i32, %arg1: i32, %arg2: memref<8x256xf32, #tpu.memory_space<vmem>>, %arg3: memref<256x512xbf16, #tpu.memory_space<vmem>>, %arg4: memref<8x512xf32, #tpu.memory_space<vmem>>) attributes {dimension_semantics = [#tpu.dimension_semantics<parallel>, #tpu.dimension_semantics<parallel>], iteration_bounds = array<i64: 1, 2>, scalar_prefetch = 0 : i64, scratch_operands = 0 : i64, tpu.core_type = #tpu.core_type<tc>, window_params = [{transform_indices = @transform_0, window_bounds = array<i64: 8, 256>}, {transform_indices = @transform_1, window_bounds = array<i64: 256, 512>}, {transform_indices = @transform_2, window_bounds = array<i64: 8, 512>}]} {
    %c0 = arith.constant 0 : index
    %c0_0 = arith.constant 0 : index
    %0 = vector.load %arg3[%c0, %c0_0] : memref<256x512xbf16, #tpu.memory_space<vmem>>, vector<256x512xbf16>
    %1 = arith.extf %0 : vector<256x512xbf16> to vector<256x512xf32>
    %c0_1 = arith.constant 0 : index
    %c0_2 = arith.constant 0 : index
    %2 = vector.load %arg2[%c0_1, %c0_2] : memref<8x256xf32, #tpu.memory_space<vmem>>, vector<8x256xf32>
    %cst = arith.constant dense<0.000000e+00> : vector<8x512xf32>
    %3 = tpu.matmul %2, %1, %cst {dimension_numbers = #tpu.dot_dimension_numbers<[1], [0], [0], [1], [0, 0, 1, 1], [], []>} : vector<8x256xf32>, vector<256x512xf32>, vector<8x512xf32> -> vector<8x512xf32>
    %c0_3 = arith.constant 0 : index
    %c0_4 = arith.constant 0 : index
    %4 = vector.load %arg4[%c0_3, %c0_4] : memref<8x512xf32, #tpu.memory_space<vmem>>, vector<8x512xf32>
    tpu.vector_store %arg4[%c0_3, %c0_4], %3 {strides = array<i32>} : memref<8x512xf32, #tpu.memory_space<vmem>>, vector<8x512xf32>,
    return
  }
  func.func @transform_0(%arg0: i32, %arg1: i32) -> (i32, i32) {
    %c0_i32 = arith.constant 0 : i32
    %c0_i32_0 = arith.constant 0 : i32
    return %arg0, %c0_i32 : i32, i32
  }
  func.func @transform_1(%arg0: i32, %arg1: i32) -> (i32, i32) {
    %c0_i32 = arith.constant 0 : i32
    %c0_i32_0 = arith.constant 0 : i32
    return %c0_i32, %arg1 : i32, i32
  }
  func.func @transform_2(%arg0: i32, %arg1: i32) -> (i32, i32) {
    %c0_i32 = arith.constant 0 : i32
    return %arg0, %arg1 : i32, i32
  }
}

</mosaic_0001>

<llo_original>
// kernel: interpolate_bilinear.1
$region0: #{interpolate_bilinear.1}
  #allocation0 [shape = 'u32[]', space=smem, size = 0x4, offset = 0x4, fixed_abs, tag = 'smem constant byte address 0x4 - core index']
  #allocation1 [shape = 'u32[72,128]{1,0:T(1,128)}', space=vmem, size = 0x9000, scoped, tag = 'internal scratch']
  %s0 = inlined_call_operand.vmem [shape: f32[8,256], index: 0, kind: input, shape index: {}]
  %s1 = inlined_call_operand.hbm [shape: bf16[256,1024], index: 1, kind: input, shape index: {}]
  %s2 = inlined_call_operand.vmem [shape: f32[8,1024], index: 2, kind: output, shape index: {}]
  %s3 = sld [smem:[#allocation0]]
  $region45: #{interpolate_bilinear.1} parent=0
    _
  %s5 = ssub.s32 1, %s3
  %s6 = scalar_select 0, %s5, %s3
  $region1: #{interpolate_bilinear.1} parent=0
    #allocation2 [shape = 'u8[524288]{0}', space=vmem, size = 0x80000, scoped, tag = 'input window, operand 1']
    #allocation3 [shape = 's32[2]{0}', space=sflag, size = 0x8, scoped, tag = 'scoped memory for interpolate_bilinear.1']
    %7 = vsyncpa [#allocation3], 0
    %s8 = scalar_lea.sflag [#allocation3], 1
    %9 = vsyncpa %s8, 0
    loop: start=0, step=1, limit=4
    $region2: #{interpolate_bilinear.1} parent=1 // loop_pre_header
      _
    $region3: #{interpolate_bilinear.1} parent=1 // loop_header
      %s11 = sphi 0, %s15
      %p12 = scmp.ge.s32.totalorder %s11, 4
      %s18 = sphi 0, %s30
      %s19 = sphi 0, %s26
      %s20 = sphi 0, %s18
      %s21 = sphi 0, %s19
      %s22 = sphi 0, %s20
      %s23 = sphi 0, %s21
      %s33 = sphi 0, %s35
      %s36 = sphi 0, %s33
      %s37 = sphi 0, %s36
      %s53 = sphi 0, %s37
      %s59 = sphi 0, %s61
      %s62 = sphi 0, %s59
      %s63 = sphi 0, %s62
      %s79 = sphi 0, %s63
      %s87 = sphi 0, %s89
      %s90 = sphi 0, %s87
      %s91 = sphi 0, %s90
      %s107 = sphi 0, %s91
    $region4: #{interpolate_bilinear.1} parent=1 // loop_header_branch
      %14 = sbr.rel (%p12) target = $region8
    $region5: #{interpolate_bilinear.1} parent=1 // loop_body
      %s16 = ssub.s32 %s11, 1
      %s17 = ssub.s32 %s11, 2
      %s24 = sadd.s32 1, %s19
      %p25 = scmp.ge.s32.totalorder %s24, 2
      %s26 = scalar_select %p25, 0, %s24
      %s27 = sadd.s32 1, %s18
      %s28 = scalar_select %p25, %s27, %s18
      %p29 = scmp.ge.s32.totalorder %s28, 1
      %s30 = scalar_select %p29, 0, %s28
      %s31 = ssub.s32 %s18, %s30
      %p32 = scmp.eq.s32.totalorder %s31, 0
      %s34 = sadd.s32 %s33, 1
      %s35 = scalar_select %p32, %s33, %s34
      %p38 = pneg %p32
      %p39 = scmp.eq.s32.totalorder %s11, 1
      %p40 = por %p38, %p39
      %p41 = scmp.ne.s32.totalorder %s33, %s36
      %p42 = scmp.eq.s32.totalorder %s11, 0
      %p43 = por %p41, %p42
      %p44 = scmp.ne.s32.totalorder %s33, %s36
      %p45 = scmp.eq.s32.totalorder %s16, 1
      %p46 = por %p44, %p45
      %p47 = scmp.ne.s32.totalorder %s36, %s37
      %p48 = scmp.eq.s32.totalorder %s16, 0
      %p49 = por %p47, %p48
      %p50 = scmp.ne.s32.totalorder %s36, %s37
      %p51 = scmp.eq.s32.totalorder %s17, 1
      %p52 = por %p50, %p51
      %p54 = scmp.ne.s32.totalorder %s37, %s53
      %p55 = scmp.eq.s32.totalorder %s17, 0
      %p56 = por %p54, %p55
      %s57 = ssub.s32 %s19, %s26
      %p58 = scmp.eq.s32.totalorder %s57, 0
      %s60 = sadd.s32 %s59, 1
      %s61 = scalar_select %p58, %s59, %s60
      %p64 = pneg %p58
      %p65 = scmp.eq.s32.totalorder %s11, 1
      %p66 = por %p64, %p65
      %p67 = scmp.ne.s32.totalorder %s59, %s62
      %p68 = scmp.eq.s32.totalorder %s11, 0
      %p69 = por %p67, %p68
      %p70 = scmp.ne.s32.totalorder %s59, %s62
      %p71 = scmp.eq.s32.totalorder %s16, 1
      %p72 = por %p70, %p71
      %p73 = scmp.ne.s32.totalorder %s62, %s63
      %p74 = scmp.eq.s32.totalorder %s16, 0
      %p75 = por %p73, %p74
      %p76 = scmp.ne.s32.totalorder %s62, %s63
      %p77 = scmp.eq.s32.totalorder %s17, 1
      %p78 = por %p76, %p77
      %p80 = scmp.ne.s32.totalorder %s63, %s79
      %p81 = scmp.eq.s32.totalorder %s17, 0
      %p82 = por %p80, %p81
      %s83 = ssub.s32 %s18, %s30
      %s84 = ssub.s32 %s19, %s26
      %s85 = sor.u32 %s83, %s84
      %p86 = scmp.eq.s32.totalorder %s85, 0
      %s88 = sadd.s32 %s87, 1
      %s89 = scalar_select %p86, %s87, %s88
      %p92 = pneg %p86
      %p93 = scmp.eq.s32.totalorder %s11, 1
      %p94 = por %p92, %p93
      %p95 = scmp.ne.s32.totalorder %s87, %s90
      %p96 = scmp.eq.s32.totalorder %s11, 0
      %p97 = por %p95, %p96
      %p98 = scmp.ne.s32.totalorder %s87, %s90
      %p99 = scmp.eq.s32.totalorder %s16, 1
      %p100 = por %p98, %p99
      %p101 = scmp.ne.s32.totalorder %s90, %s91
      %p102 = scmp.eq.s32.totalorder %s16, 0
      %p103 = por %p101, %p102
      %p104 = scmp.ne.s32.totalorder %s90, %s91
      %p105 = scmp.eq.s32.totalorder %s17, 1
      %p106 = por %p104, %p105
      %p108 = scmp.ne.s32.totalorder %s91, %s107
      %p109 = scmp.eq.s32.totalorder %s17, 0
      %p110 = por %p108, %p109
      %p111 = scmp.le.s32.totalorder 1, %s11
      %p112 = scmp.lt.s32.totalorder %s11, 3
      %p113 = pnand %p111, %p112
      %p114 = pneg %p113
      // Predicated region
      $region9: #{interpolate_bilinear.1} parent=5 // pred_check
        _
      $region10: #{interpolate_bilinear.1} parent=5 // pred_check_branch
        %116 = sbr.rel (%p113) target = $region12
      $region11: #{interpolate_bilinear.1} parent=5 // pred_region
        %s117 = ssub.s32 %s11, 1
        // Predicated region
        $region13: #{interpolate_bilinear.1} parent=11 // pred_check
          %p118 = pneg %p49
        $region14: #{interpolate_bilinear.1} parent=11 // pred_check_branch
          %120 = sbr.rel (%p118) target = $region16
        $region15: #{interpolate_bilinear.1} parent=11 // pred_region
          %p121 = scmp.lt.s32.totalorder %s20, 0
          %s122 = scalar_select %p121, %s20, 0
          %s123 = smul.addr %s122, 2
          %s124 = smul.addr %s123, 8
          %s125 = scalar_lea.vmem %s0, %s124
        $region16: #{interpolate_bilinear.1} parent=11 // pred_fallthru
          _
      $region12: #{interpolate_bilinear.1} parent=5 // pred_fallthru
        _
      %p126 = scmp.lt.s32.totalorder %s11, 2
      // Predicated region
      $region17: #{interpolate_bilinear.1} parent=5 // pred_check
        %p127 = pneg %p126
      $region18: #{interpolate_bilinear.1} parent=5 // pred_check_branch
        %129 = sbr.rel (%p127) target = $region20
      $region19: #{interpolate_bilinear.1} parent=5 // pred_region
        // Predicated region
        $region21: #{interpolate_bilinear.1} parent=19 // pred_check
          %p130 = pneg %p69
        $region22: #{interpolate_bilinear.1} parent=19 // pred_check_branch
          %132 = sbr.rel (%p130) target = $region24
        $region23: #{interpolate_bilinear.1} parent=19 // pred_region
          %s133 = sand.u32 %s59, 1
          %s134 = scalar_lea.sflag [#allocation3], %s133
          %s135 = sand.u32 %s59, 1
          %s136 = smul.addr %s135, 512
          %s137 = scalar_lea.vmem [#allocation2], %s136
          %s138 = smul.u32 4, %s19
          %140 = vsyncadd %s134, 0
          %s141 = smul.addr %s138, 4
          %s142 = scalar_lea.hbm %s1, %s141
          %s143 = sshll.u32 %s142, 4
          %s144 = int_to_ptr.hbm [resolvable:$true] %s143
          %s145 = sshll.u32 %s137, 4
          %s146 = int_to_ptr.vmem [resolvable:$true] %s145
          %151 = dma.hbm_to_vmem [thread:$0]  %s144, 8192, %s146, %s134, 512, 256, 16
        $region24: #{interpolate_bilinear.1} parent=19 // pred_fallthru
          _
      $region20: #{interpolate_bilinear.1} parent=5 // pred_fallthru
        _
      %p152 = scmp.le.s32.totalorder 1, %s11
      %p153 = scmp.lt.s32.totalorder %s11, 3
      %p154 = pnand %p152, %p153
      %p155 = pneg %p154
      // Predicated region
      $region25: #{interpolate_bilinear.1} parent=5 // pred_check
        _
      $region26: #{interpolate_bilinear.1} parent=5 // pred_check_branch
        %157 = sbr.rel (%p154) target = $region28
      $region27: #{interpolate_bilinear.1} parent=5 // pred_region
        %s158 = ssub.s32 %s11, 1
        %s159 = sand.u32 %s62, 1
        %s160 = scalar_lea.sflag [#allocation3], %s159
        %s161 = sand.u32 %s62, 1
        %s162 = smul.addr %s161, 512
        %s163 = scalar_lea.vmem [#allocation2], %s162
        // Predicated region
        $region29: #{interpolate_bilinear.1} parent=27 // pred_check
          %p164 = pneg %p75
        $region30: #{interpolate_bilinear.1} parent=27 // pred_check_branch
          %166 = sbr.rel (%p164) target = $region32
        $region31: #{interpolate_bilinear.1} parent=27 // pred_region
          %168 = dma.done %s160, 8192
        $region32: #{interpolate_bilinear.1} parent=27 // pred_fallthru
          _
        %p169 = scmp.lt.s32.totalorder %s20, 0
        %s170 = scalar_select %p169, %s20, 0
        %s171 = smul.addr %s170, 2
        %s172 = smul.addr %s171, 8
        %s173 = scalar_lea.vmem %s0, %s172
        %p174 = pneg %p49
        %p175 = pneg %p46
        %s176 = sand.u32 %s62, 1
        %s177 = scalar_lea.sflag [#allocation3], %s176
        %s178 = sand.u32 %s62, 1
        %s179 = smul.addr %s178, 512
        %s180 = scalar_lea.vmem [#allocation2], %s179
        %p181 = pneg %p75
        %p182 = pneg %p72
        %p183 = pneg %p103
        %p184 = pneg %p100
        %s185 = smul.u32 4, %s21
        %p186 = scmp.lt.s32.totalorder %s20, 0
        %s187 = scalar_select %p186, %s20, 0
        %p188 = scmp.lt.s32.totalorder %s185, 7
        %s189 = scalar_select %p188, %s185, 7
        %s190 = smul.addr %s187, 8
        %s191 = sadd.s32 %s189, %s190
        %s192 = smul.addr %s191, 8
        %s193 = scalar_lea.vmem %s2, %s192
        %p194 = scmp.lt.s32.totalorder %s20, 0
        %s195 = scalar_select %p194, %s20, 0
        %s196 = smul.addr %s195, 2
        %s197 = smul.addr %s196, 8
        %s198 = scalar_lea.vmem %s0, %s197
        %s199 = smul.u32 4, %s21
        %s200 = smul.u32 4, %s21
        %p201 = scmp.lt.s32.totalorder %s20, 0
        %s202 = scalar_select %p201, %s20, 0
        %p203 = scmp.lt.s32.totalorder %s200, 7
        %s204 = scalar_select %p203, %s200, 7
        %s205 = smul.addr %s202, 8
        %s206 = sadd.s32 %s204, %s205
        %s207 = smul.addr %s206, 8
        %s208 = scalar_lea.vmem %s2, %s207
        %s209 = smul.u32 4, %s21
        %v210 = vld [vmem:[%s163] sm:$0xff]
        %v211 = vld [vmem:[%s163 + $0x8] sm:$0xff]
        %v212 = vld [vmem:[%s163 + $0x10] sm:$0xff]
        %v213 = vld [vmem:[%s163 + $0x18] sm:$0xff]
        %v214 = vld [vmem:[%s163 + $0x20] sm:$0xff]
        %v215 = vld [vmem:[%s163 + $0x28] sm:$0xff]
        %v216 = vld [vmem:[%s163 + $0x30] sm:$0xff]
        %v217 = vld [vmem:[%s163 + $0x38] sm:$0xff]
        %v218 = vld [vmem:[%s163 + $0x40] sm:$0xff]
        %v219 = vld [vmem:[%s163 + $0x48] sm:$0xff]
        %v220 = vld [vmem:[%s163 + $0x50] sm:$0xff]
        %v221 = vld [vmem:[%s163 + $0x58] sm:$0xff]
        %v222 = vld [vmem:[%s163 + $0x60] sm:$0xff]
        %v223 = vld [vmem:[%s163 + $0x68] sm:$0xff]
        %v224 = vld [vmem:[%s163 + $0x70] sm:$0xff]
        %v225 = vld [vmem:[%s163 + $0x78] sm:$0xff]
        %v226 = vld [vmem:[%s163 + $0x80] sm:$0xff]
        %v227 = vld [vmem:[%s163 + $0x88] sm:$0xff]
        %v228 = vld [vmem:[%s163 + $0x90] sm:$0xff]
        %v229 = vld [vmem:[%s163 + $0x98] sm:$0xff]
        %v230 = vld [vmem:[%s163 + $0xa0] sm:$0xff]
        %v231 = vld [vmem:[%s163 + $0xa8] sm:$0xff]
        %v232 = vld [vmem:[%s163 + $0xb0] sm:$0xff]
        %v233 = vld [vmem:[%s163 + $0xb8] sm:$0xff]
        %v234 = vld [vmem:[%s163 + $0xc0] sm:$0xff]
        %v235 = vld [vmem:[%s163 + $0xc8] sm:$0xff]
        %v236 = vld [vmem:[%s163 + $0xd0] sm:$0xff]
        %v237 = vld [vmem:[%s163 + $0xd8] sm:$0xff]
        %v238 = vld [vmem:[%s163 + $0xe0] sm:$0xff]
        %v239 = vld [vmem:[%s163 + $0xe8] sm:$0xff]
        %v240 = vld [vmem:[%s163 + $0xf0] sm:$0xff]
        %v241 = vld [vmem:[%s163 + $0xf8] sm:$0xff]
        %v242 = vld [vmem:[%s163 + $0x100] sm:$0xff]
        %v243 = vld [vmem:[%s163 + $0x108] sm:$0xff]
        %v244 = vld [vmem:[%s163 + $0x110] sm:$0xff]
        %v245 = vld [vmem:[%s163 + $0x118] sm:$0xff]
        %v246 = vld [vmem:[%s163 + $0x120] sm:$0xff]
        %v247 = vld [vmem:[%s163 + $0x128] sm:$0xff]
        %v248 = vld [vmem:[%s163 + $0x130] sm:$0xff]
        %v249 = vld [vmem:[%s163 + $0x138] sm:$0xff]
        %v250 = vld [vmem:[%s163 + $0x140] sm:$0xff]
        %v251 = vld [vmem:[%s163 + $0x148] sm:$0xff]
        %v252 = vld [vmem:[%s163 + $0x150] sm:$0xff]
        %v253 = vld [vmem:[%s163 + $0x158] sm:$0xff]
        %v254 = vld [vmem:[%s163 + $0x160] sm:$0xff]
        %v255 = vld [vmem:[%s163 + $0x168] sm:$0xff]
        %v256 = vld [vmem:[%s163 + $0x170] sm:$0xff]
        %v257 = vld [vmem:[%s163 + $0x178] sm:$0xff]
        %v258 = vld [vmem:[%s163 + $0x180] sm:$0xff]
        %v259 = vld [vmem:[%s163 + $0x188] sm:$0xff]
        %v260 = vld [vmem:[%s163 + $0x190] sm:$0xff]
        %v261 = vld [vmem:[%s163 + $0x198] sm:$0xff]
        %v262 = vld [vmem:[%s163 + $0x1a0] sm:$0xff]
        %v263 = vld [vmem:[%s163 + $0x1a8] sm:$0xff]
        %v264 = vld [vmem:[%s163 + $0x1b0] sm:$0xff]
        %v265 = vld [vmem:[%s163 + $0x1b8] sm:$0xff]
        %v266 = vld [vmem:[%s163 + $0x1c0] sm:$0xff]
        %v267 = vld [vmem:[%s163 + $0x1c8] sm:$0xff]
        %v268 = vld [vmem:[%s163 + $0x1d0] sm:$0xff]
        %v269 = vld [vmem:[%s163 + $0x1d8] sm:$0xff]
        %v270 = vld [vmem:[%s163 + $0x1e0] sm:$0xff]
        %v271 = vld [vmem:[%s163 + $0x1e8] sm:$0xff]
        %v272 = vld [vmem:[%s163 + $0x1f0] sm:$0xff]
        %v273 = vld [vmem:[%s163 + $0x1f8] sm:$0xff]
        %v274 = vunpack.c.l.bf16 %v210
        %v275 = vunpack.c.h.bf16 %v210
        %v276 = vunpack.c.l.bf16 %v211
        %v277 = vunpack.c.h.bf16 %v211
        %v278 = vunpack.c.l.bf16 %v212
        %v279 = vunpack.c.h.bf16 %v212
        %v280 = vunpack.c.l.bf16 %v213
        %v281 = vunpack.c.h.bf16 %v213
        %v282 = vunpack.c.l.bf16 %v214
        %v283 = vunpack.c.h.bf16 %v214
        %v284 = vunpack.c.l.bf16 %v215
        %v285 = vunpack.c.h.bf16 %v215
        %v286 = vunpack.c.l.bf16 %v216
        %v287 = vunpack.c.h.bf16 %v216
        %v288 = vunpack.c.l.bf16 %v217
        %v289 = vunpack.c.h.bf16 %v217
        %v290 = vunpack.c.l.bf16 %v218
        %v291 = vunpack.c.h.bf16 %v218
        %v292 = vunpack.c.l.bf16 %v219
        %v293 = vunpack.c.h.bf16 %v219
        %v294 = vunpack.c.l.bf16 %v220
        %v295 = vunpack.c.h.bf16 %v220
        %v296 = vunpack.c.l.bf16 %v221
        %v297 = vunpack.c.h.bf16 %v221
        %v298 = vunpack.c.l.bf16 %v222
        %v299 = vunpack.c.h.bf16 %v222
        %v300 = vunpack.c.l.bf16 %v223
        %v301 = vunpack.c.h.bf16 %v223
        %v302 = vunpack.c.l.bf16 %v224
        %v303 = vunpack.c.h.bf16 %v224
        %v304 = vunpack.c.l.bf16 %v225
        %v305 = vunpack.c.h.bf16 %v225
        %v306 = vunpack.c.l.bf16 %v226
        %v307 = vunpack.c.h.bf16 %v226
        %v308 = vunpack.c.l.bf16 %v227
        %v309 = vunpack.c.h.bf16 %v227
        %v310 = vunpack.c.l.bf16 %v228
        %v311 = vunpack.c.h.bf16 %v228
        %v312 = vunpack.c.l.bf16 %v229
        %v313 = vunpack.c.h.bf16 %v229
        %v314 = vunpack.c.l.bf16 %v230
        %v315 = vunpack.c.h.bf16 %v230
        %v316 = vunpack.c.l.bf16 %v231
        %v317 = vunpack.c.h.bf16 %v231
        %v318 = vunpack.c.l.bf16 %v232
        %v319 = vunpack.c.h.bf16 %v232
        %v320 = vunpack.c.l.bf16 %v233
        %v321 = vunpack.c.h.bf16 %v233
        %v322 = vunpack.c.l.bf16 %v234
        %v323 = vunpack.c.h.bf16 %v234
        %v324 = vunpack.c.l.bf16 %v235
        %v325 = vunpack.c.h.bf16 %v235
        %v326 = vunpack.c.l.bf16 %v236
        %v327 = vunpack.c.h.bf16 %v236
        %v328 = vunpack.c.l.bf16 %v237
        %v329 = vunpack.c.h.bf16 %v237
        %v330 = vunpack.c.l.bf16 %v238
        %v331 = vunpack.c.h.bf16 %v238
        %v332 = vunpack.c.l.bf16 %v239
        %v333 = vunpack.c.h.bf16 %v239
        %v334 = vunpack.c.l.bf16 %v240
        %v335 = vunpack.c.h.bf16 %v240
        %v336 = vunpack.c.l.bf16 %v241
        %v337 = vunpack.c.h.bf16 %v241
        %v338 = vunpack.c.l.bf16 %v242
        %v339 = vunpack.c.h.bf16 %v242
        %v340 = vunpack.c.l.bf16 %v243
        %v341 = vunpack.c.h.bf16 %v243
        %v342 = vunpack.c.l.bf16 %v244
        %v343 = vunpack.c.h.bf16 %v244
        %v344 = vunpack.c.l.bf16 %v245
        %v345 = vunpack.c.h.bf16 %v245
        %v346 = vunpack.c.l.bf16 %v246
        %v347 = vunpack.c.h.bf16 %v246
        %v348 = vunpack.c.l.bf16 %v247
        %v349 = vunpack.c.h.bf16 %v247
        %v350 = vunpack.c.l.bf16 %v248
        %v351 = vunpack.c.h.bf16 %v248
        %v352 = vunpack.c.l.bf16 %v249
        %v353 = vunpack.c.h.bf16 %v249
        %v354 = vunpack.c.l.bf16 %v250
        %v355 = vunpack.c.h.bf16 %v250
        %v356 = vunpack.c.l.bf16 %v251
        %v357 = vunpack.c.h.bf16 %v251
        %v358 = vunpack.c.l.bf16 %v252
        %v359 = vunpack.c.h.bf16 %v252
        %v360 = vunpack.c.l.bf16 %v253
        %v361 = vunpack.c.h.bf16 %v253
        %v362 = vunpack.c.l.bf16 %v254
        %v363 = vunpack.c.h.bf16 %v254
        %v364 = vunpack.c.l.bf16 %v255
        %v365 = vunpack.c.h.bf16 %v255
        %v366 = vunpack.c.l.bf16 %v256
        %v367 = vunpack.c.h.bf16 %v256
        %v368 = vunpack.c.l.bf16 %v257
        %v369 = vunpack.c.h.bf16 %v257
        %v370 = vunpack.c.l.bf16 %v258
        %v371 = vunpack.c.h.bf16 %v258
        %v372 = vunpack.c.l.bf16 %v259
        %v373 = vunpack.c.h.bf16 %v259
        %v374 = vunpack.c.l.bf16 %v260
        %v375 = vunpack.c.h.bf16 %v260
        %v376 = vunpack.c.l.bf16 %v261
        %v377 = vunpack.c.h.bf16 %v261
        %v378 = vunpack.c.l.bf16 %v262
        %v379 = vunpack.c.h.bf16 %v262
        %v380 = vunpack.c.l.bf16 %v263
        %v381 = vunpack.c.h.bf16 %v263
        %v382 = vunpack.c.l.bf16 %v264
        %v383 = vunpack.c.h.bf16 %v264
        %v384 = vunpack.c.l.bf16 %v265
        %v385 = vunpack.c.h.bf16 %v265
        %v386 = vunpack.c.l.bf16 %v266
        %v387 = vunpack.c.h.bf16 %v266
        %v388 = vunpack.c.l.bf16 %v267
        %v389 = vunpack.c.h.bf16 %v267
        %v390 = vunpack.c.l.bf16 %v268
        %v391 = vunpack.c.h.bf16 %v268
        %v392 = vunpack.c.l.bf16 %v269
        %v393 = vunpack.c.h.bf16 %v269
        %v394 = vunpack.c.l.bf16 %v270
        %v395 = vunpack.c.h.bf16 %v270
        %v396 = vunpack.c.l.bf16 %v271
        %v397 = vunpack.c.h.bf16 %v271
        %v398 = vunpack.c.l.bf16 %v272
        %v399 = vunpack.c.h.bf16 %v272
        %v400 = vunpack.c.l.bf16 %v273
        %v401 = vunpack.c.h.bf16 %v273
        %v402 = vld [vmem:[%s198] sm:$0xff]
        %v403 = vld [vmem:[%s198 + $0x8] sm:$0xff]
        %404 = vmatpush.msra.mxu0 %v334
        %405 = vmatpush.msra.mxu0 %v330
        %406 = vmatpush.msra.mxu0 %v326
        %407 = vmatpush.msra.mxu0 %v322
        %408 = vmatpush.msra.mxu0 %v318
        %409 = vmatpush.msra.mxu0 %v314
        %410 = vmatpush.msra.mxu0 %v310
        %411 = vmatpush.msra.mxu0 %v306
        %412 = vmatpush.msra.mxu0 %v302
        %413 = vmatpush.msra.mxu0 %v298
        %414 = vmatpush.msra.mxu0 %v294
        %415 = vmatpush.msra.mxu0 %v290
        %416 = vmatpush.msra.mxu0 %v286
        %417 = vmatpush.msra.mxu0 %v282
        %418 = vmatpush.msra.mxu0 %v278
        %419 = vmatpush.msra.mxu0 %v274
        %420 = vmatmul.f32.gmra.mxu0 %v402
        %v421 = vpop.f32.mrf.mxu0
        %v422 = vadd.f32 0.0, %v421
        %423 = vdwg.mxu0
        %424 = vmatpush.msra.mxu0 %v398
        %425 = vmatpush.msra.mxu0 %v394
        %426 = vmatpush.msra.mxu0 %v390
        %427 = vmatpush.msra.mxu0 %v386
        %428 = vmatpush.msra.mxu0 %v382
        %429 = vmatpush.msra.mxu0 %v378
        %430 = vmatpush.msra.mxu0 %v374
        %431 = vmatpush.msra.mxu0 %v370
        %432 = vmatpush.msra.mxu0 %v366
        %433 = vmatpush.msra.mxu0 %v362
        %434 = vmatpush.msra.mxu0 %v358
        %435 = vmatpush.msra.mxu0 %v354
        %436 = vmatpush.msra.mxu0 %v350
        %437 = vmatpush.msra.mxu0 %v346
        %438 = vmatpush.msra.mxu0 %v342
        %439 = vmatpush.msra.mxu0 %v338
        %440 = vmatmul.f32.gmra.mxu0 %v403
        %v441 = vpop.f32.mrf.mxu0
        %v442 = vadd.f32 %v422, %v441
        %443 = vdwg.mxu0
        %444 = vmatpush.msra.mxu0 %v335
        %445 = vmatpush.msra.mxu0 %v331
        %446 = vmatpush.msra.mxu0 %v327
        %447 = vmatpush.msra.mxu0 %v323
        %448 = vmatpush.msra.mxu0 %v319
        %449 = vmatpush.msra.mxu0 %v315
        %450 = vmatpush.msra.mxu0 %v311
        %451 = vmatpush.msra.mxu0 %v307
        %452 = vmatpush.msra.mxu0 %v303
        %453 = vmatpush.msra.mxu0 %v299
        %454 = vmatpush.msra.mxu0 %v295
        %455 = vmatpush.msra.mxu0 %v291
        %456 = vmatpush.msra.mxu0 %v287
        %457 = vmatpush.msra.mxu0 %v283
        %458 = vmatpush.msra.mxu0 %v279
        %459 = vmatpush.msra.mxu0 %v275
        %460 = vmatmul.f32.gmra.mxu0 %v402
        %v461 = vpop.f32.mrf.mxu0
        %v462 = vadd.f32 0.0, %v461
        %463 = vdwg.mxu0
        %464 = vmatpush.msra.mxu0 %v399
        %465 = vmatpush.msra.mxu0 %v395
        %466 = vmatpush.msra.mxu0 %v391
        %467 = vmatpush.msra.mxu0 %v387
        %468 = vmatpush.msra.mxu0 %v383
        %469 = vmatpush.msra.mxu0 %v379
        %470 = vmatpush.msra.mxu0 %v375
        %471 = vmatpush.msra.mxu0 %v371
        %472 = vmatpush.msra.mxu0 %v367
        %473 = vmatpush.msra.mxu0 %v363
        %474 = vmatpush.msra.mxu0 %v359
        %475 = vmatpush.msra.mxu0 %v355
        %476 = vmatpush.msra.mxu0 %v351
        %477 = vmatpush.msra.mxu0 %v347
        %478 = vmatpush.msra.mxu0 %v343
        %479 = vmatpush.msra.mxu0 %v339
        %480 = vmatmul.f32.gmra.mxu0 %v403
        %v481 = vpop.f32.mrf.mxu0
        %v482 = vadd.f32 %v462, %v481
        %483 = vdwg.mxu0
        %484 = vmatpush.msra.mxu0 %v336
        %485 = vmatpush.msra.mxu0 %v332
        %486 = vmatpush.msra.mxu0 %v328
        %487 = vmatpush.msra.mxu0 %v324
        %488 = vmatpush.msra.mxu0 %v320
        %489 = vmatpush.msra.mxu0 %v316
        %490 = vmatpush.msra.mxu0 %v312
        %491 = vmatpush.msra.mxu0 %v308
        %492 = vmatpush.msra.mxu0 %v304
        %493 = vmatpush.msra.mxu0 %v300
        %494 = vmatpush.msra.mxu0 %v296
        %495 = vmatpush.msra.mxu0 %v292
        %496 = vmatpush.msra.mxu0 %v288
        %497 = vmatpush.msra.mxu0 %v284
        %498 = vmatpush.msra.mxu0 %v280
        %499 = vmatpush.msra.mxu0 %v276
        %500 = vmatmul.f32.gmra.mxu0 %v402
        %v501 = vpop.f32.mrf.mxu0
        %v502 = vadd.f32 0.0, %v501
        %503 = vdwg.mxu0
        %504 = vmatpush.msra.mxu0 %v400
        %505 = vmatpush.msra.mxu0 %v396
        %506 = vmatpush.msra.mxu0 %v392
        %507 = vmatpush.msra.mxu0 %v388
        %508 = vmatpush.msra.mxu0 %v384
        %509 = vmatpush.msra.mxu0 %v380
        %510 = vmatpush.msra.mxu0 %v376
        %511 = vmatpush.msra.mxu0 %v372
        %512 = vmatpush.msra.mxu0 %v368
        %513 = vmatpush.msra.mxu0 %v364
        %514 = vmatpush.msra.mxu0 %v360
        %515 = vmatpush.msra.mxu0 %v356
        %516 = vmatpush.msra.mxu0 %v352
        %517 = vmatpush.msra.mxu0 %v348
        %518 = vmatpush.msra.mxu0 %v344
        %519 = vmatpush.msra.mxu0 %v340
        %520 = vmatmul.f32.gmra.mxu0 %v403
        %v521 = vpop.f32.mrf.mxu0
        %v522 = vadd.f32 %v502, %v521
        %523 = vdwg.mxu0
        %524 = vmatpush.msra.mxu0 %v337
        %525 = vmatpush.msra.mxu0 %v333
        %526 = vmatpush.msra.mxu0 %v329
        %527 = vmatpush.msra.mxu0 %v325
        %528 = vmatpush.msra.mxu0 %v321
        %529 = vmatpush.msra.mxu0 %v317
        %530 = vmatpush.msra.mxu0 %v313
        %531 = vmatpush.msra.mxu0 %v309
        %532 = vmatpush.msra.mxu0 %v305
        %533 = vmatpush.msra.mxu0 %v301
        %534 = vmatpush.msra.mxu0 %v297
        %535 = vmatpush.msra.mxu0 %v293
        %536 = vmatpush.msra.mxu0 %v289
        %537 = vmatpush.msra.mxu0 %v285
        %538 = vmatpush.msra.mxu0 %v281
        %539 = vmatpush.msra.mxu0 %v277
        %540 = vmatmul.f32.gmra.mxu0 %v402
        %v541 = vpop.f32.mrf.mxu0
        %v542 = vadd.f32 0.0, %v541
        %543 = vdwg.mxu0
        %544 = vmatpush.msra.mxu0 %v401
        %545 = vmatpush.msra.mxu0 %v397
        %546 = vmatpush.msra.mxu0 %v393
        %547 = vmatpush.msra.mxu0 %v389
        %548 = vmatpush.msra.mxu0 %v385
        %549 = vmatpush.msra.mxu0 %v381
        %550 = vmatpush.msra.mxu0 %v377
        %551 = vmatpush.msra.mxu0 %v373
        %552 = vmatpush.msra.mxu0 %v369
        %553 = vmatpush.msra.mxu0 %v365
        %554 = vmatpush.msra.mxu0 %v361
        %555 = vmatpush.msra.mxu0 %v357
        %556 = vmatpush.msra.mxu0 %v353
        %557 = vmatpush.msra.mxu0 %v349
        %558 = vmatpush.msra.mxu0 %v345
        %559 = vmatpush.msra.mxu0 %v341
        %560 = vmatmul.f32.gmra.mxu0 %v403
        %v561 = vpop.f32.mrf.mxu0
        %v562 = vadd.f32 %v542, %v561
        %563 = vdwg.mxu0
        %564 = vst [vmem:[%s208] sm:$0xff] %v442
        %565 = vst [vmem:[%s208 + $0x8] sm:$0xff] %v482
        %566 = vst [vmem:[%s208 + $0x10] sm:$0xff] %v522
        %567 = vst [vmem:[%s208 + $0x18] sm:$0xff] %v562
        %s568 = smul.u32 4, %s21
        %p569 = scmp.lt.s32.totalorder %s20, 0
        %s570 = scalar_select %p569, %s20, 0
        %p571 = scmp.lt.s32.totalorder %s568, 7
        %s572 = scalar_select %p571, %s568, 7
        %s573 = smul.addr %s570, 8
        %s574 = sadd.s32 %s572, %s573
        %s575 = smul.addr %s574, 8
        %s576 = scalar_lea.vmem %s2, %s575
        // Predicated region
        $region33: #{interpolate_bilinear.1} parent=27 // pred_check
          %p577 = pneg %p100
        $region34: #{interpolate_bilinear.1} parent=27 // pred_check_branch
          %579 = sbr.rel (%p577) target = $region36
        $region35: #{interpolate_bilinear.1} parent=27 // pred_region
          %s580 = smul.u32 4, %s21
        $region36: #{interpolate_bilinear.1} parent=27 // pred_fallthru
          _
      $region28: #{interpolate_bilinear.1} parent=5 // pred_fallthru
        _
      %p581 = scmp.le.s32.totalorder 2, %s11
      // Predicated region
      $region37: #{interpolate_bilinear.1} parent=5 // pred_check
        %p582 = pneg %p581
      $region38: #{interpolate_bilinear.1} parent=5 // pred_check_branch
        %584 = sbr.rel (%p582) target = $region40
      $region39: #{interpolate_bilinear.1} parent=5 // pred_region
        %s585 = ssub.s32 %s11, 2
        // Predicated region
        $region41: #{interpolate_bilinear.1} parent=39 // pred_check
          %p586 = pneg %p106
        $region42: #{interpolate_bilinear.1} parent=39 // pred_check_branch
          %588 = sbr.rel (%p586) target = $region44
        $region43: #{interpolate_bilinear.1} parent=39 // pred_region
          %s589 = smul.u32 4, %s23
          %p590 = scmp.lt.s32.totalorder %s22, 0
          %s591 = scalar_select %p590, %s22, 0
          %p592 = scmp.lt.s32.totalorder %s589, 7
          %s593 = scalar_select %p592, %s589, 7
          %s594 = smul.addr %s591, 8
          %s595 = sadd.s32 %s593, %s594
          %s596 = smul.addr %s595, 8
          %s597 = scalar_lea.vmem %s2, %s596
        $region44: #{interpolate_bilinear.1} parent=39 // pred_fallthru
          _
      $region40: #{interpolate_bilinear.1} parent=5 // pred_fallthru
        _
    $region6: #{interpolate_bilinear.1} parent=1 // loop_footer
      %s15 = sadd.s32 1, %s11
    $region7: #{interpolate_bilinear.1} parent=1 // loop_footer_branch
      %10 = sbr.rel target = $region3
    $region8: #{interpolate_bilinear.1} parent=1 // loop_exit
      _
    %598 = vsyncpa [#allocation3], 1
    %s599 = scalar_lea.sflag [#allocation3], 1
    %600 = vsyncpa %s599, 1

</llo_original>
